<compile_context>
chip_gen: v5e
topology: v5e:2x2
jax: 0.10.0
libtpu: 0.0.40
codegen_flags: <defaults>
</compile_context>

<pallas_src>
import jax
import jax.numpy as jnp
from jax.experimental import pallas as pl
from jax.experimental.pallas import tpu as pltpu


def _round_up(n, m):
    return ((n + m - 1) // m) * m


# ----------------------------- Pallas kernel -------------------------------
def _resmlp_center_kernel(
    xm_ref,    # (1, F, TM)    x^T main block (chain rows on lanes)
    xh_ref,    # (1, F, HALO)  x^T halo block (next HALO columns, window overlap)
    tbT_ref,   # (1, H, 1)     per-batch bias: b0 + t_embedding @ w0t, transposed
    w0kT_ref,  # (K, H, F)     first linear, split per window offset k, transposed
    w1T_ref,   # (H, H)        residual linear, transposed
    b1T_ref,   # (H, 1)
    w2cT_ref,  # (F, H)        last linear, CENTER output features only, transposed
    b2cT_ref,  # (F, 1)
    out_ref,   # (1, F, TM)    lane-dense center-score block
):
    f32 = jnp.float32
    xm = xm_ref[0]                                   # (F, TM)
    K = w0kT_ref.shape[0]
    TM = xm.shape[-1]

    # First layer with the unfold fused in-kernel:
    #   h[:, i] = sum_k w0_k^T @ x^T[:, i + k]  (+ time-embedding bias)
    acc = jnp.dot(w0kT_ref[0], xm, preferred_element_type=f32)          # (H, TM)
    if K > 1:
        xfull = jnp.concatenate([xm, xh_ref[0]], axis=-1)               # (F, TM+HALO)
        n = xfull.shape[-1]
        for k in range(1, K):                        # static, small (K = 2*order+1)
            xk = pltpu.roll(xfull, shift=n - k, axis=1)[:, :TM]         # x^T[:, k:k+TM]
            acc = acc + jnp.dot(w0kT_ref[k], xk, preferred_element_type=f32)
    h = acc + tbT_ref[0]                                                # (H, TM)

    # Residual block: h += relu(w1^T @ h + b1^T)
    h = h + jnp.maximum(
        jnp.dot(w1T_ref[...], h, preferred_element_type=f32) + b1T_ref[...], 0.0)

    # Last linear, center features only (everything else is discarded by fold)
    out_ref[0] = (jnp.dot(w2cT_ref[...], h, preferred_element_type=f32)
                  + b2cT_ref[...])


# ------------------------------ wrapper -------------------------------------
def mc_score_net(x, t, params, *, order, tile_m=1024):
    """MCScoreNet.forward (ScoreNet branch, context=None).

    x: (B, L, F) float32, t: (B, 1) or (B,) float32 -> (B, L, F) float32
    """
    B, L, F = x.shape
    K = 2 * order + 1
    Lp = L - 2 * order
    assert Lp > 0

    (freqs, we1, be1, we2, be2, w0x, w0t, b0, w1, b1, w2, b2) = params
    H = w1.shape[0]
    Dx = K * F
    Dout = w2.shape[1]
    assert w0x.shape[0] == Dx and Dout == Dx

    # ---- TimeEmbedding (constant across the window axis) -> first-layer bias --
    tf = t.reshape(B, 1) * freqs                                   # (B, 16)
    emb = jnp.concatenate([jnp.cos(tf), jnp.sin(tf)], axis=-1)     # (B, 32)
    g = emb @ we1 + be1                                            # (B, 256)
    g = g * jax.nn.sigmoid(g)                                      # SiLU
    te = g @ we2 + be2                                             # (B, E)
    tb = te @ w0t + b0                                             # (B, H)
    tbT = tb[:, :, None]                                           # (B, H, 1)

    # ---- tiling ---------------------------------------------------------------
    HALO = max(_round_up(2 * order, 128), 128)                     # halo width (lanes)
    TM = min(_round_up(max(tile_m, 128), 128), _round_up(Lp, 128))
    TM = _round_up(TM, HALO)                                       # TM % HALO == 0
    Lp_pad = _round_up(Lp, TM)
    Lx = Lp_pad + HALO

    # transposed chain, padded (layout plumbing for the lane-dense kernel blocks)
    xT = jnp.transpose(x, (0, 2, 1))                               # (B, F, L)
    xTp = jnp.pad(xT, ((0, 0), (0, 0), (0, Lx - L)))               # (B, F, Lx)

    # transposed weights for the lane-dense kernel
    w0kT = jnp.transpose(w0x.reshape(K, F, H), (0, 2, 1))          # (K, H, F)
    w1T = w1.T                                                     # (H, H)
    b1T = b1.T                                                     # (H, 1)
    c0 = order * F
    w2cT = w2[:, c0:c0 + F].T                                      # (F, H)  center slice
    b2cT = b2[:, c0:c0 + F].T                                      # (F, 1)

    grid = (B, Lp_pad // TM)
    stride = TM // HALO

    def full_spec(a):
        return pl.BlockSpec(a.shape, lambda b, j: (0,) * a.ndim)

    centerT = pl.pallas_call(
        _resmlp_center_kernel,
        out_shape=jax.ShapeDtypeStruct((B, F, Lp_pad), jnp.float32),
        grid_spec=pltpu.PrefetchScalarGridSpec(
            num_scalar_prefetch=0,
            grid=grid,
            in_specs=[
                pl.BlockSpec((1, F, TM), lambda b, j: (b, 0, j)),                    # x main
                pl.BlockSpec((1, F, HALO), lambda b, j: (b, 0, (j + 1) * stride)),   # x halo
                pl.BlockSpec((1, H, 1), lambda b, j: (b, 0, 0)),                     # tbT
                full_spec(w0kT), full_spec(w1T), full_spec(b1T),
                full_spec(w2cT), full_spec(b2cT),
            ],
            out_specs=pl.BlockSpec((1, F, TM), lambda b, j: (b, 0, j)),
        ),
        compiler_params=pltpu.CompilerParams(
            dimension_semantics=("parallel", "parallel")),
    )(xTp, xTp, tbT, w0kT, w1T, b1T, w2cT, b2cT)

    center = jnp.transpose(centerT[:, :, :Lp], (0, 2, 1))          # (B, Lp, F)

    # ---- window edges: only 2 rows per batch element, plain JAX (glue) --------
    def resmlp_rows(xw):                       # xw: (B, Dx)
        hh = xw @ w0x + tb                     # == xw @ w0x + te @ w0t + b0
        hh = hh + jnp.maximum(hh @ w1 + b1, 0.0)
        return hh @ w2 + b2                    # (B, Dout)

    if order > 0:
        xw_first = x[:, :K, :].reshape(B, Dx)                      # window row 0
        xw_last = x[:, Lp - 1:Lp - 1 + K, :].reshape(B, Dx)        # window row Lp-1
        s_first = resmlp_rows(xw_first).reshape(B, K, F)
        s_last = resmlp_rows(xw_last).reshape(B, K, F)
        head = s_first[:, :order]                                  # (B, order, F)
        tail = s_last[:, K - order:]                               # (B, order, F)
        return jnp.concatenate([head, center, tail], axis=1)       # (B, L, F)
    return center


# ------------------------- deterministic parameters --------------------------
def init_params(key, *, features, order, embedding=16, hidden=64):
    K = 2 * order + 1
    Dx = features * K            # features of the unfolded chain
    Din = Dx + embedding         # ResMLP input (context = 0)
    Dout = Dx

    def lin(k, fan_in, fan_out):
        kw, kb = jax.random.split(k)
        bound = 1.0 / jnp.sqrt(fan_in)
        w = jax.random.uniform(kw, (fan_in, fan_out), jnp.float32, -bound, bound)
        b = jax.random.uniform(kb, (1, fan_out), jnp.float32, -bound, bound)
        return w, b

    k1, k2, k3, k4, k5 = jax.random.split(key, 5)
    we1, be1 = lin(k1, 32, 256)          # TimeEmbedding Linear(32, 256)
    we2, be2 = lin(k2, 256, embedding)   # TimeEmbedding Linear(256, embedding)
    w0, b0 = lin(k3, Din, hidden)        # ResMLP Linear(Din, H)
    w1, b1 = lin(k4, hidden, hidden)     # ResMLP residual Linear(H, H)
    w2, b2 = lin(k5, hidden, Dout)       # ResMLP Linear(H, Dout)

    freqs = (jnp.pi * jnp.arange(1, 17, dtype=jnp.float32)).reshape(1, 16)
    w0x, w0t = w0[:Dx], w0[Dx:]          # split for the (x, t_emb) concat-free matmul

    return (freqs, we1, be1, we2, be2, w0x, w0t, b0, w1, b1, w2, b2)


if __name__ == "__main__":
    features, order = 4, 1
    B, L = 2, 10                              # -> Lp = L - 2*order = 8 rows/batch

    key = jax.random.PRNGKey(0)
    kx, kt, kp = jax.random.split(key, 3)
    x = jax.random.normal(kx, (B, L, features), dtype=jnp.float32)
    t = jax.random.uniform(kt, (B, 1), dtype=jnp.float32)

    params = init_params(kp, features=features, order=order)

    out = mc_score_net(x, t, params, order=order)
    jax.block_until_ready(out)
    assert out.shape == x.shape and out.dtype == jnp.float32
    assert bool(jnp.all(jnp.isfinite(out)))
    print("KERNEL_OK")
</pallas_src>

<mosaic_0001>
module attributes {stable_mosaic.version = 11 : i64} {
  func.func @_resmlp_center_kernel(%arg0: i32, %arg1: i32, %arg2: memref<1x4x128xf32, #tpu.memory_space<vmem>>, %arg3: memref<1x4x128xf32, #tpu.memory_space<vmem>>, %arg4: memref<1x64x1xf32, #tpu.memory_space<vmem>>, %arg5: memref<3x64x4xf32, #tpu.memory_space<vmem>>, %arg6: memref<64x64xf32, #tpu.memory_space<vmem>>, %arg7: memref<64x1xf32, #tpu.memory_space<vmem>>, %arg8: memref<4x64xf32, #tpu.memory_space<vmem>>, %arg9: memref<4x1xf32, #tpu.memory_space<vmem>>, %arg10: memref<1x4x128xf32, #tpu.memory_space<vmem>>) attributes {dimension_semantics = [#tpu.dimension_semantics<parallel>, #tpu.dimension_semantics<parallel>], iteration_bounds = array<i64: 2, 1>, scalar_prefetch = 0 : i64, scratch_operands = 0 : i64, tpu.core_type = #tpu.core_type<tc>, window_params = [{transform_indices = @transform_0, window_bounds = array<i64: 1, 4, 128>}, {transform_indices = @transform_1, window_bounds = array<i64: 1, 4, 128>}, {transform_indices = @transform_2, window_bounds = array<i64: 1, 64, 1>}, {pipeline_mode = #tpu.pipeline_mode<synchronous>, transform_indices = @transform_3, window_bounds = array<i64: 3, 64, 4>}, {pipeline_mode = #tpu.pipeline_mode<synchronous>, transform_indices = @transform_4, window_bounds = array<i64: 64, 64>}, {pipeline_mode = #tpu.pipeline_mode<synchronous>, transform_indices = @transform_5, window_bounds = array<i64: 64, 1>}, {pipeline_mode = #tpu.pipeline_mode<synchronous>, transform_indices = @transform_6, window_bounds = array<i64: 4, 64>}, {pipeline_mode = #tpu.pipeline_mode<synchronous>, transform_indices = @transform_7, window_bounds = array<i64: 4, 1>}, {transform_indices = @transform_8, window_bounds = array<i64: 1, 4, 128>}]} {
    %c0 = arith.constant 0 : index
    %c0_0 = arith.constant 0 : index
    %c0_1 = arith.constant 0 : index
    %0 = vector.load %arg2[%c0, %c0_0, %c0_1] : memref<1x4x128xf32, #tpu.memory_space<vmem>>, vector<1x4x128xf32>
    %1 = vector.shape_cast %0 : vector<1x4x128xf32> to vector<4x128xf32>
    %c0_2 = arith.constant 0 : index
    %c0_3 = arith.constant 0 : index
    %c0_4 = arith.constant 0 : index
    %2 = vector.load %arg5[%c0_2, %c0_3, %c0_4] : memref<3x64x4xf32, #tpu.memory_space<vmem>>, vector<1x64x4xf32>
    %3 = vector.shape_cast %2 : vector<1x64x4xf32> to vector<64x4xf32>
    %cst = arith.constant dense<0.000000e+00> : vector<64x128xf32>
    %4 = tpu.matmul %3, %1, %cst {dimension_numbers = #tpu.dot_dimension_numbers<[1], [0], [0], [1], [0, 0, 1, 1], [], []>} : vector<64x4xf32>, vector<4x128xf32>, vector<64x128xf32> -> vector<64x128xf32>
    %c0_5 = arith.constant 0 : index
    %c0_6 = arith.constant 0 : index
    %c0_7 = arith.constant 0 : index
    %5 = vector.load %arg3[%c0_5, %c0_6, %c0_7] : memref<1x4x128xf32, #tpu.memory_space<vmem>>, vector<1x4x128xf32>
    %6 = vector.shape_cast %5 : vector<1x4x128xf32> to vector<4x128xf32>
    %7 = tpu.concatenate %1, %6 in 1 : vector<4x128xf32>, vector<4x128xf32> -> vector<4x256xf32>
    %c255_i32 = arith.constant 255 : i32
    %8 = tpu.dynamic_rotate %7 by %c255_i32 dim 1 : vector<4x256xf32>, i32 -> vector<4x256xf32>
    %9 = vector.extract_strided_slice %8 {offsets = [0, 0], sizes = [4, 128], strides = [1, 1]} : vector<4x256xf32> to vector<4x128xf32>
    %c1 = arith.constant 1 : index
    %c0_8 = arith.constant 0 : index
    %c0_9 = arith.constant 0 : index
    %10 = vector.load %arg5[%c1, %c0_8, %c0_9] : memref<3x64x4xf32, #tpu.memory_space<vmem>>, vector<1x64x4xf32>
    %11 = vector.shape_cast %10 : vector<1x64x4xf32> to vector<64x4xf32>
    %cst_10 = arith.constant dense<0.000000e+00> : vector<64x128xf32>
    %12 = tpu.matmul %11, %9, %cst_10 {dimension_numbers = #tpu.dot_dimension_numbers<[1], [0], [0], [1], [0, 0, 1, 1], [], []>} : vector<64x4xf32>, vector<4x128xf32>, vector<64x128xf32> -> vector<64x128xf32>
    %13 = arith.addf %4, %12 : vector<64x128xf32>
    %c254_i32 = arith.constant 254 : i32
    %14 = tpu.dynamic_rotate %7 by %c254_i32 dim 1 : vector<4x256xf32>, i32 -> vector<4x256xf32>
    %15 = vector.extract_strided_slice %14 {offsets = [0, 0], sizes = [4, 128], strides = [1, 1]} : vector<4x256xf32> to vector<4x128xf32>
    %c2 = arith.constant 2 : index
    %c0_11 = arith.constant 0 : index
    %c0_12 = arith.constant 0 : index
    %16 = vector.load %arg5[%c2, %c0_11, %c0_12] : memref<3x64x4xf32, #tpu.memory_space<vmem>>, vector<1x64x4xf32>
    %17 = vector.shape_cast %16 : vector<1x64x4xf32> to vector<64x4xf32>
    %cst_13 = arith.constant dense<0.000000e+00> : vector<64x128xf32>
    %18 = tpu.matmul %17, %15, %cst_13 {dimension_numbers = #tpu.dot_dimension_numbers<[1], [0], [0], [1], [0, 0, 1, 1], [], []>} : vector<64x4xf32>, vector<4x128xf32>, vector<64x128xf32> -> vector<64x128xf32>
    %19 = arith.addf %13, %18 : vector<64x128xf32>
    %c0_14 = arith.constant 0 : index
    %c0_15 = arith.constant 0 : index
    %c0_16 = arith.constant 0 : index
    %20 = vector.load %arg4[%c0_14, %c0_15, %c0_16] : memref<1x64x1xf32, #tpu.memory_space<vmem>>, vector<1x64x1xf32>
    %21 = vector.shape_cast %20 : vector<1x64x1xf32> to vector<64x1xf32>
    %22 = vector.broadcast %21 : vector<64x1xf32> to vector<64x128xf32>
    %23 = arith.addf %19, %22 : vector<64x128xf32>
    %c0_17 = arith.constant 0 : index
    %c0_18 = arith.constant 0 : index
    %24 = vector.load %arg6[%c0_17, %c0_18] : memref<64x64xf32, #tpu.memory_space<vmem>>, vector<64x64xf32>
    %cst_19 = arith.constant dense<0.000000e+00> : vector<64x128xf32>
    %25 = tpu.matmul %24, %23, %cst_19 {dimension_numbers = #tpu.dot_dimension_numbers<[1], [0], [0], [1], [0, 0, 1, 1], [], []>} : vector<64x64xf32>, vector<64x128xf32>, vector<64x128xf32> -> vector<64x128xf32>
    %c0_20 = arith.constant 0 : index
    %c0_21 = arith.constant 0 : index
    %26 = vector.load %arg7[%c0_20, %c0_21] : memref<64x1xf32, #tpu.memory_space<vmem>>, vector<64x1xf32>
    %27 = vector.broadcast %26 : vector<64x1xf32> to vector<64x128xf32>
    %28 = arith.addf %25, %27 : vector<64x128xf32>
    %cst_22 = arith.constant 0.000000e+00 : f32
    %29 = vector.broadcast %cst_22 : f32 to vector<64x128xf32>
    %30 = arith.maximumf %28, %29 : vector<64x128xf32>
    %31 = arith.addf %23, %30 : vector<64x128xf32>
    %c0_23 = arith.constant 0 : index
    %c0_24 = arith.constant 0 : index
    %32 = vector.load %arg8[%c0_23, %c0_24] : memref<4x64xf32, #tpu.memory_space<vmem>>, vector<4x64xf32>
    %cst_25 = arith.constant dense<0.000000e+00> : vector<4x128xf32>
    %33 = tpu.matmul %32, %31, %cst_25 {dimension_numbers = #tpu.dot_dimension_numbers<[1], [0], [0], [1], [0, 0, 1, 1], [], []>} : vector<4x64xf32>, vector<64x128xf32>, vector<4x128xf32> -> vector<4x128xf32>
    %c0_26 = arith.constant 0 : index
    %c0_27 = arith.constant 0 : index
    %34 = vector.load %arg9[%c0_26, %c0_27] : memref<4x1xf32, #tpu.memory_space<vmem>>, vector<4x1xf32>
    %35 = vector.broadcast %34 : vector<4x1xf32> to vector<4x128xf32>
    %36 = arith.addf %33, %35 : vector<4x128xf32>
    %c0_28 = arith.constant 0 : index
    %c0_29 = arith.constant 0 : index
    %c0_30 = arith.constant 0 : index
    %37 = vector.load %arg10[%c0_28, %c0_29, %c0_30] : memref<1x4x128xf32, #tpu.memory_space<vmem>>, vector<1x4x128xf32>
    %38 = vector.shape_cast %37 : vector<1x4x128xf32> to vector<4x128xf32>
    %39 = vector.shape_cast %36 : vector<4x128xf32> to vector<1x4x128xf32>
    tpu.vector_store %arg10[%c0_28, %c0_29, %c0_30], %39 {strides = array<i32>} : memref<1x4x128xf32, #tpu.memory_space<vmem>>, vector<1x4x128xf32>,
    return
  }
  func.func @transform_0(%arg0: i32, %arg1: i32) -> (i32, i32, i32) {
    %c0_i32 = arith.constant 0 : i32
    %c0_i32_0 = arith.constant 0 : i32
    return %arg0, %c0_i32, %arg1 : i32, i32, i32
  }
  func.func @transform_1(%arg0: i32, %arg1: i32) -> (i32, i32, i32) {
    %c1_i32 = arith.constant 1 : i32
    %0 = arith.addi %arg1, %c1_i32 : i32
    %c1_i32_0 = arith.constant 1 : i32
    %1 = arith.muli %0, %c1_i32_0 : i32
    %c0_i32 = arith.constant 0 : i32
    %c0_i32_1 = arith.constant 0 : i32
    return %arg0, %c0_i32, %1 : i32, i32, i32
  }
  func.func @transform_2(%arg0: i32, %arg1: i32) -> (i32, i32, i32) {
    %c0_i32 = arith.constant 0 : i32
    %c0_i32_0 = arith.constant 0 : i32
    %c0_i32_1 = arith.constant 0 : i32
    return %arg0, %c0_i32, %c0_i32_0 : i32, i32, i32
  }
  func.func @transform_3(%arg0: i32, %arg1: i32) -> (i32, i32, i32) {
    %c0_i32 = arith.constant 0 : i32
    %c0_i32_0 = arith.constant 0 : i32
    %c0_i32_1 = arith.constant 0 : i32
    %c0_i32_2 = arith.constant 0 : i32
    return %c0_i32, %c0_i32_0, %c0_i32_1 : i32, i32, i32
  }
  func.func @transform_4(%arg0: i32, %arg1: i32) -> (i32, i32) {
    %c0_i32 = arith.constant 0 : i32
    %c0_i32_0 = arith.constant 0 : i32
    %c0_i32_1 = arith.constant 0 : i32
    return %c0_i32, %c0_i32_0 : i32, i32
  }
  func.func @transform_5(%arg0: i32, %arg1: i32) -> (i32, i32) {
    %c0_i32 = arith.constant 0 : i32
    %c0_i32_0 = arith.constant 0 : i32
    %c0_i32_1 = arith.constant 0 : i32
    return %c0_i32, %c0_i32_0 : i32, i32
  }
  func.func @transform_6(%arg0: i32, %arg1: i32) -> (i32, i32) {
    %c0_i32 = arith.constant 0 : i32
    %c0_i32_0 = arith.constant 0 : i32
    %c0_i32_1 = arith.constant 0 : i32
    return %c0_i32, %c0_i32_0 : i32, i32
  }
  func.func @transform_7(%arg0: i32, %arg1: i32) -> (i32, i32) {
    %c0_i32 = arith.constant 0 : i32
    %c0_i32_0 = arith.constant 0 : i32
    %c0_i32_1 = arith.constant 0 : i32
    return %c0_i32, %c0_i32_0 : i32, i32
  }
  func.func @transform_8(%arg0: i32, %arg1: i32) -> (i32, i32, i32) {
    %c0_i32 = arith.constant 0 : i32
    %c0_i32_0 = arith.constant 0 : i32
    return %arg0, %c0_i32, %arg1 : i32, i32, i32
  }
}

</mosaic_0001>

<llo_original>
// kernel: tpu_custom_call.1
$region0: #{tpu_custom_call.1}
  #allocation0 [shape = 'u32[]', space=smem, size = 0x4, offset = 0x4, fixed_abs, tag = 'smem constant byte address 0x4 - core index']
  #allocation1 [shape = 'u32[72,128]{1,0:T(1,128)}', space=vmem, size = 0x9000, scoped, tag = 'internal scratch']
  %s0 = inlined_call_operand.vmem [shape: f32[2,4,256], index: 0, kind: input, shape index: {}]
  %s1 = inlined_call_operand.vmem [shape: f32[2,4,256], index: 1, kind: input, shape index: {}]
  %s2 = inlined_call_operand.vmem [shape: f32[2,64,1], index: 2, kind: input, shape index: {}]
  %s3 = inlined_call_operand.vmem [shape: f32[3,64,4], index: 3, kind: input, shape index: {}]
  %s4 = inlined_call_operand.vmem [shape: f32[64,64], index: 4, kind: input, shape index: {}]
  %s5 = inlined_call_operand.vmem [shape: f32[64,1], index: 5, kind: input, shape index: {}]
  %s6 = inlined_call_operand.vmem [shape: f32[4,64], index: 6, kind: input, shape index: {}]
  %s7 = inlined_call_operand.vmem [shape: f32[4,1], index: 7, kind: input, shape index: {}]
  %s8 = inlined_call_operand.hbm [shape: f32[2,4,128], index: 8, kind: output, shape index: {}]
  %s9 = sld [smem:[#allocation0]]
  $region65: #{tpu_custom_call.1} parent=0
    _
  %s11 = ssub.s32 1, %s9
  %s12 = scalar_select 0, %s11, %s9
  $region1: #{tpu_custom_call.1} parent=0
    #allocation2 [shape = 'u8[4096]{0}', space=vmem, size = 0x1000, scoped, tag = 'output window, operand 0']
    #allocation3 [shape = 's32[2]{0}', space=sflag, size = 0x8, scoped, tag = 'scoped memory for tpu_custom_call.1']
    %13 = vsyncpa [#allocation3], 0
    %s14 = scalar_lea.sflag [#allocation3], 1
    %15 = vsyncpa %s14, 0
    loop: start=0, step=1, limit=4
    $region2: #{tpu_custom_call.1} parent=1 // loop_pre_header
      _
    $region3: #{tpu_custom_call.1} parent=1 // loop_header
      %s17 = sphi 0, %s21
      %p18 = scmp.ge.s32.totalorder %s17, 4
      %s24 = sphi 0, %s36
      %s25 = sphi 0, %s32
      %s26 = sphi 0, %s24
      %s27 = sphi 0, %s25
      %s28 = sphi 0, %s26
      %s29 = sphi 0, %s27
      %s41 = sphi 0, %s43
      %s44 = sphi 0, %s41
      %s45 = sphi 0, %s44
      %s61 = sphi 0, %s45
      %s71 = sphi 0, %s73
      %s74 = sphi 0, %s71
      %s75 = sphi 0, %s74
      %s91 = sphi 0, %s75
      %s97 = sphi 0, %s99
      %s100 = sphi 0, %s97
      %s101 = sphi 0, %s100
      %s117 = sphi 0, %s101
      %s121 = sphi 0, %s121
      %s123 = sphi 0, %s121
      %s124 = sphi 0, %s123
      %s138 = sphi 0, %s124
      %s142 = sphi 0, %s142
      %s144 = sphi 0, %s142
      %s145 = sphi 0, %s144
      %s159 = sphi 0, %s145
      %s163 = sphi 0, %s163
      %s165 = sphi 0, %s163
      %s166 = sphi 0, %s165
      %s180 = sphi 0, %s166
      %s184 = sphi 0, %s184
      %s186 = sphi 0, %s184
      %s187 = sphi 0, %s186
      %s201 = sphi 0, %s187
      %s205 = sphi 0, %s205
      %s207 = sphi 0, %s205
      %s208 = sphi 0, %s207
      %s222 = sphi 0, %s208
      %s230 = sphi 0, %s232
      %s233 = sphi 0, %s230
      %s234 = sphi 0, %s233
      %s250 = sphi 0, %s234
    $region4: #{tpu_custom_call.1} parent=1 // loop_header_branch
      %20 = sbr.rel (%p18) target = $region8
    $region5: #{tpu_custom_call.1} parent=1 // loop_body
      %s22 = ssub.s32 %s17, 1
      %s23 = ssub.s32 %s17, 2
      %s30 = sadd.s32 1, %s25
      %p31 = scmp.ge.s32.totalorder %s30, 1
      %s32 = scalar_select %p31, 0, %s30
      %s33 = sadd.s32 1, %s24
      %s34 = scalar_select %p31, %s33, %s24
      %p35 = scmp.ge.s32.totalorder %s34, 2
      %s36 = scalar_select %p35, 0, %s34
      %s37 = ssub.s32 %s24, %s36
      %s38 = ssub.s32 %s25, %s32
      %s39 = sor.u32 %s37, %s38
      %p40 = scmp.eq.s32.totalorder %s39, 0
      %s42 = sadd.s32 %s41, 1
      %s43 = scalar_select %p40, %s41, %s42
      %p46 = pneg %p40
      %p47 = scmp.eq.s32.totalorder %s17, 1
      %p48 = por %p46, %p47
      %p49 = scmp.ne.s32.totalorder %s41, %s44
      %p50 = scmp.eq.s32.totalorder %s17, 0
      %p51 = por %p49, %p50
      %p52 = scmp.ne.s32.totalorder %s41, %s44
      %p53 = scmp.eq.s32.totalorder %s22, 1
      %p54 = por %p52, %p53
      %p55 = scmp.ne.s32.totalorder %s44, %s45
      %p56 = scmp.eq.s32.totalorder %s22, 0
      %p57 = por %p55, %p56
      %p58 = scmp.ne.s32.totalorder %s44, %s45
      %p59 = scmp.eq.s32.totalorder %s23, 1
      %p60 = por %p58, %p59
      %p62 = scmp.ne.s32.totalorder %s45, %s61
      %p63 = scmp.eq.s32.totalorder %s23, 0
      %p64 = por %p62, %p63
      %s65 = sadd.s32 %s25, 1
      %s66 = sadd.s32 %s32, 1
      %s67 = ssub.s32 %s24, %s36
      %s68 = ssub.s32 %s65, %s66
      %s69 = sor.u32 %s67, %s68
      %p70 = scmp.eq.s32.totalorder %s69, 0
      %s72 = sadd.s32 %s71, 1
      %s73 = scalar_select %p70, %s71, %s72
      %p76 = pneg %p70
      %p77 = scmp.eq.s32.totalorder %s17, 1
      %p78 = por %p76, %p77
      %p79 = scmp.ne.s32.totalorder %s71, %s74
      %p80 = scmp.eq.s32.totalorder %s17, 0
      %p81 = por %p79, %p80
      %p82 = scmp.ne.s32.totalorder %s71, %s74
      %p83 = scmp.eq.s32.totalorder %s22, 1
      %p84 = por %p82, %p83
      %p85 = scmp.ne.s32.totalorder %s74, %s75
      %p86 = scmp.eq.s32.totalorder %s22, 0
      %p87 = por %p85, %p86
      %p88 = scmp.ne.s32.totalorder %s74, %s75
      %p89 = scmp.eq.s32.totalorder %s23, 1
      %p90 = por %p88, %p89
      %p92 = scmp.ne.s32.totalorder %s75, %s91
      %p93 = scmp.eq.s32.totalorder %s23, 0
      %p94 = por %p92, %p93
      %s95 = ssub.s32 %s24, %s36
      %p96 = scmp.eq.s32.totalorder %s95, 0
      %s98 = sadd.s32 %s97, 1
      %s99 = scalar_select %p96, %s97, %s98
      %p102 = pneg %p96
      %p103 = scmp.eq.s32.totalorder %s17, 1
      %p104 = por %p102, %p103
      %p105 = scmp.ne.s32.totalorder %s97, %s100
      %p106 = scmp.eq.s32.totalorder %s17, 0
      %p107 = por %p105, %p106
      %p108 = scmp.ne.s32.totalorder %s97, %s100
      %p109 = scmp.eq.s32.totalorder %s22, 1
      %p110 = por %p108, %p109
      %p111 = scmp.ne.s32.totalorder %s100, %s101
      %p112 = scmp.eq.s32.totalorder %s22, 0
      %p113 = por %p111, %p112
      %p114 = scmp.ne.s32.totalorder %s100, %s101
      %p115 = scmp.eq.s32.totalorder %s23, 1
      %p116 = por %p114, %p115
      %p118 = scmp.ne.s32.totalorder %s101, %s117
      %p119 = scmp.eq.s32.totalorder %s23, 0
      %p120 = por %p118, %p119
      %s122 = sadd.s32 %s121, 1
      %p125 = scmp.eq.s32.totalorder %s17, 1
      %p126 = scmp.ne.s32.totalorder %s121, %s123
      %p127 = scmp.eq.s32.totalorder %s17, 0
      %p128 = por %p126, %p127
      %p129 = scmp.ne.s32.totalorder %s121, %s123
      %p130 = scmp.eq.s32.totalorder %s22, 1
      %p131 = por %p129, %p130
      %p132 = scmp.ne.s32.totalorder %s123, %s124
      %p133 = scmp.eq.s32.totalorder %s22, 0
      %p134 = por %p132, %p133
      %p135 = scmp.ne.s32.totalorder %s123, %s124
      %p136 = scmp.eq.s32.totalorder %s23, 1
      %p137 = por %p135, %p136
      %p139 = scmp.ne.s32.totalorder %s124, %s138
      %p140 = scmp.eq.s32.totalorder %s23, 0
      %p141 = por %p139, %p140
      %s143 = sadd.s32 %s142, 1
      %p146 = scmp.eq.s32.totalorder %s17, 1
      %p147 = scmp.ne.s32.totalorder %s142, %s144
      %p148 = scmp.eq.s32.totalorder %s17, 0
      %p149 = por %p147, %p148
      %p150 = scmp.ne.s32.totalorder %s142, %s144
      %p151 = scmp.eq.s32.totalorder %s22, 1
      %p152 = por %p150, %p151
      %p153 = scmp.ne.s32.totalorder %s144, %s145
      %p154 = scmp.eq.s32.totalorder %s22, 0
      %p155 = por %p153, %p154
      %p156 = scmp.ne.s32.totalorder %s144, %s145
      %p157 = scmp.eq.s32.totalorder %s23, 1
      %p158 = por %p156, %p157
      %p160 = scmp.ne.s32.totalorder %s145, %s159
      %p161 = scmp.eq.s32.totalorder %s23, 0
      %p162 = por %p160, %p161
      %s164 = sadd.s32 %s163, 1
      %p167 = scmp.eq.s32.totalorder %s17, 1
      %p168 = scmp.ne.s32.totalorder %s163, %s165
      %p169 = scmp.eq.s32.totalorder %s17, 0
      %p170 = por %p168, %p169
      %p171 = scmp.ne.s32.totalorder %s163, %s165
      %p172 = scmp.eq.s32.totalorder %s22, 1
      %p173 = por %p171, %p172
      %p174 = scmp.ne.s32.totalorder %s165, %s166
      %p175 = scmp.eq.s32.totalorder %s22, 0
      %p176 = por %p174, %p175
      %p177 = scmp.ne.s32.totalorder %s165, %s166
      %p178 = scmp.eq.s32.totalorder %s23, 1
      %p179 = por %p177, %p178
      %p181 = scmp.ne.s32.totalorder %s166, %s180
      %p182 = scmp.eq.s32.totalorder %s23, 0
      %p183 = por %p181, %p182
      %s185 = sadd.s32 %s184, 1
      %p188 = scmp.eq.s32.totalorder %s17, 1
      %p189 = scmp.ne.s32.totalorder %s184, %s186
      %p190 = scmp.eq.s32.totalorder %s17, 0
      %p191 = por %p189, %p190
      %p192 = scmp.ne.s32.totalorder %s184, %s186
      %p193 = scmp.eq.s32.totalorder %s22, 1
      %p194 = por %p192, %p193
      %p195 = scmp.ne.s32.totalorder %s186, %s187
      %p196 = scmp.eq.s32.totalorder %s22, 0
      %p197 = por %p195, %p196
      %p198 = scmp.ne.s32.totalorder %s186, %s187
      %p199 = scmp.eq.s32.totalorder %s23, 1
      %p200 = por %p198, %p199
      %p202 = scmp.ne.s32.totalorder %s187, %s201
      %p203 = scmp.eq.s32.totalorder %s23, 0
      %p204 = por %p202, %p203
      %s206 = sadd.s32 %s205, 1
      %p209 = scmp.eq.s32.totalorder %s17, 1
      %p210 = scmp.ne.s32.totalorder %s205, %s207
      %p211 = scmp.eq.s32.totalorder %s17, 0
      %p212 = por %p210, %p211
      %p213 = scmp.ne.s32.totalorder %s205, %s207
      %p214 = scmp.eq.s32.totalorder %s22, 1
      %p215 = por %p213, %p214
      %p216 = scmp.ne.s32.totalorder %s207, %s208
      %p217 = scmp.eq.s32.totalorder %s22, 0
      %p218 = por %p216, %p217
      %p219 = scmp.ne.s32.totalorder %s207, %s208
      %p220 = scmp.eq.s32.totalorder %s23, 1
      %p221 = por %p219, %p220
      %p223 = scmp.ne.s32.totalorder %s208, %s222
      %p224 = scmp.eq.s32.totalorder %s23, 0
      %p225 = por %p223, %p224
      %s226 = ssub.s32 %s24, %s36
      %s227 = ssub.s32 %s25, %s32
      %s228 = sor.u32 %s226, %s227
      %p229 = scmp.eq.s32.totalorder %s228, 0
      %s231 = sadd.s32 %s230, 1
      %s232 = scalar_select %p229, %s230, %s231
      %p235 = pneg %p229
      %p236 = scmp.eq.s32.totalorder %s17, 1
      %p237 = por %p235, %p236
      %p238 = scmp.ne.s32.totalorder %s230, %s233
      %p239 = scmp.eq.s32.totalorder %s17, 0
      %p240 = por %p238, %p239
      %p241 = scmp.ne.s32.totalorder %s230, %s233
      %p242 = scmp.eq.s32.totalorder %s22, 1
      %p243 = por %p241, %p242
      %p244 = scmp.ne.s32.totalorder %s233, %s234
      %p245 = scmp.eq.s32.totalorder %s22, 0
      %p246 = por %p244, %p245
      %p247 = scmp.ne.s32.totalorder %s233, %s234
      %p248 = scmp.eq.s32.totalorder %s23, 1
      %p249 = por %p247, %p248
      %p251 = scmp.ne.s32.totalorder %s234, %s250
      %p252 = scmp.eq.s32.totalorder %s23, 0
      %p253 = por %p251, %p252
      %p254 = scmp.le.s32.totalorder 1, %s17
      %p255 = scmp.lt.s32.totalorder %s17, 3
      %p256 = pnand %p254, %p255
      %p257 = pneg %p256
      // Predicated region
      $region9: #{tpu_custom_call.1} parent=5 // pred_check
        _
      $region10: #{tpu_custom_call.1} parent=5 // pred_check_branch
        %259 = sbr.rel (%p256) target = $region12
      $region11: #{tpu_custom_call.1} parent=5 // pred_region
        %s260 = ssub.s32 %s17, 1
        // Predicated region
        $region13: #{tpu_custom_call.1} parent=11 // pred_check
          %p261 = pneg %p134
        $region14: #{tpu_custom_call.1} parent=11 // pred_check_branch
          %263 = sbr.rel (%p261) target = $region16
        $region15: #{tpu_custom_call.1} parent=11 // pred_region
          _
        $region16: #{tpu_custom_call.1} parent=11 // pred_fallthru
          _
        // Predicated region
        $region17: #{tpu_custom_call.1} parent=11 // pred_check
          %p264 = pneg %p155
        $region18: #{tpu_custom_call.1} parent=11 // pred_check_branch
          %266 = sbr.rel (%p264) target = $region20
        $region19: #{tpu_custom_call.1} parent=11 // pred_region
          _
        $region20: #{tpu_custom_call.1} parent=11 // pred_fallthru
          _
        // Predicated region
        $region21: #{tpu_custom_call.1} parent=11 // pred_check
          %p267 = pneg %p176
        $region22: #{tpu_custom_call.1} parent=11 // pred_check_branch
          %269 = sbr.rel (%p267) target = $region24
        $region23: #{tpu_custom_call.1} parent=11 // pred_region
          _
        $region24: #{tpu_custom_call.1} parent=11 // pred_fallthru
          _
        // Predicated region
        $region25: #{tpu_custom_call.1} parent=11 // pred_check
          %p270 = pneg %p197
        $region26: #{tpu_custom_call.1} parent=11 // pred_check_branch
          %272 = sbr.rel (%p270) target = $region28
        $region27: #{tpu_custom_call.1} parent=11 // pred_region
          _
        $region28: #{tpu_custom_call.1} parent=11 // pred_fallthru
          _
        // Predicated region
        $region29: #{tpu_custom_call.1} parent=11 // pred_check
          %p273 = pneg %p218
        $region30: #{tpu_custom_call.1} parent=11 // pred_check_branch
          %275 = sbr.rel (%p273) target = $region32
        $region31: #{tpu_custom_call.1} parent=11 // pred_region
          _
        $region32: #{tpu_custom_call.1} parent=11 // pred_fallthru
          _
      $region12: #{tpu_custom_call.1} parent=5 // pred_fallthru
        _
      %p276 = scmp.lt.s32.totalorder %s17, 2
      // Predicated region
      $region33: #{tpu_custom_call.1} parent=5 // pred_check
        %p277 = pneg %p276
      $region34: #{tpu_custom_call.1} parent=5 // pred_check_branch
        %279 = sbr.rel (%p277) target = $region36
      $region35: #{tpu_custom_call.1} parent=5 // pred_region
        // Predicated region
        $region37: #{tpu_custom_call.1} parent=35 // pred_check
          %p280 = pneg %p51
        $region38: #{tpu_custom_call.1} parent=35 // pred_check_branch
          %282 = sbr.rel (%p280) target = $region40
        $region39: #{tpu_custom_call.1} parent=35 // pred_region
          %p283 = scmp.lt.s32.totalorder %s24, 1
          %s284 = scalar_select %p283, %s24, 1
          %p285 = scmp.lt.s32.totalorder %s25, 1
          %s286 = scalar_select %p285, %s25, 1
          %s287 = smul.addr %s284, 2
          %s288 = sadd.s32 %s286, %s287
          %s289 = smul.addr %s288, 4
          %s290 = scalar_lea.vmem %s0, %s289
        $region40: #{tpu_custom_call.1} parent=35 // pred_fallthru
          _
        // Predicated region
        $region41: #{tpu_custom_call.1} parent=35 // pred_check
          %p291 = pneg %p81
        $region42: #{tpu_custom_call.1} parent=35 // pred_check_branch
          %293 = sbr.rel (%p291) target = $region44
        $region43: #{tpu_custom_call.1} parent=35 // pred_region
          %s294 = sadd.s32 %s25, 1
          %p295 = scmp.lt.s32.totalorder %s24, 1
          %s296 = scalar_select %p295, %s24, 1
          %p297 = scmp.lt.s32.totalorder %s294, 1
          %s298 = scalar_select %p297, %s294, 1
          %s299 = smul.addr %s296, 2
          %s300 = sadd.s32 %s298, %s299
          %s301 = smul.addr %s300, 4
          %s302 = scalar_lea.vmem %s1, %s301
          %s303 = sadd.s32 %s25, 1
        $region44: #{tpu_custom_call.1} parent=35 // pred_fallthru
          _
        // Predicated region
        $region45: #{tpu_custom_call.1} parent=35 // pred_check
          %p304 = pneg %p107
        $region46: #{tpu_custom_call.1} parent=35 // pred_check_branch
          %306 = sbr.rel (%p304) target = $region48
        $region47: #{tpu_custom_call.1} parent=35 // pred_region
          %p307 = scmp.lt.s32.totalorder %s24, 1
          %s308 = scalar_select %p307, %s24, 1
          %s309 = smul.addr %s308, 8
          %s310 = smul.addr %s309, 8
          %s311 = scalar_lea.vmem %s2, %s310
        $region48: #{tpu_custom_call.1} parent=35 // pred_fallthru
          _
      $region36: #{tpu_custom_call.1} parent=5 // pred_fallthru
        _
      %p312 = scmp.le.s32.totalorder 1, %s17
      %p313 = scmp.lt.s32.totalorder %s17, 3
      %p314 = pnand %p312, %p313
      %p315 = pneg %p314
      // Predicated region
      $region49: #{tpu_custom_call.1} parent=5 // pred_check
        _
      $region50: #{tpu_custom_call.1} parent=5 // pred_check_branch
        %317 = sbr.rel (%p314) target = $region52
      $region51: #{tpu_custom_call.1} parent=5 // pred_region
        %s318 = ssub.s32 %s17, 1
        %p319 = scmp.lt.s32.totalorder %s26, 1
        %s320 = scalar_select %p319, %s26, 1
        %p321 = scmp.lt.s32.totalorder %s27, 1
        %s322 = scalar_select %p321, %s27, 1
        %s323 = smul.addr %s320, 2
        %s324 = sadd.s32 %s322, %s323
        %s325 = smul.addr %s324, 4
        %s326 = scalar_lea.vmem %s0, %s325
        %p327 = pneg %p57
        %p328 = pneg %p54
        %s329 = sadd.s32 %s27, 1
        %p330 = scmp.lt.s32.totalorder %s26, 1
        %s331 = scalar_select %p330, %s26, 1
        %p332 = scmp.lt.s32.totalorder %s329, 1
        %s333 = scalar_select %p332, %s329, 1
        %s334 = smul.addr %s331, 2
        %s335 = sadd.s32 %s333, %s334
        %s336 = smul.addr %s335, 4
        %s337 = scalar_lea.vmem %s1, %s336
        %p338 = pneg %p87
        %p339 = pneg %p84
        %p340 = scmp.lt.s32.totalorder %s26, 1
        %s341 = scalar_select %p340, %s26, 1
        %s342 = smul.addr %s341, 8
        %s343 = smul.addr %s342, 8
        %s344 = scalar_lea.vmem %s2, %s343
        %p345 = pneg %p113
        %p346 = pneg %p110
        %p347 = pneg %p134
        %p348 = pneg %p131
        %p349 = pneg %p155
        %p350 = pneg %p152
        %p351 = pneg %p176
        %p352 = pneg %p173
        %p353 = pneg %p197
        %p354 = pneg %p194
        %p355 = pneg %p218
        %p356 = pneg %p215
        %p357 = pneg %p246
        %p358 = pneg %p243
        %s359 = sand.u32 %s233, 1
        %s360 = scalar_lea.sflag [#allocation3], %s359
        %s361 = sand.u32 %s233, 1
        %s362 = smul.addr %s361, 4
        %s363 = scalar_lea.vmem [#allocation2], %s362
        %p364 = scmp.lt.s32.totalorder %s26, 1
        %s365 = scalar_select %p364, %s26, 1
        %p366 = scmp.lt.s32.totalorder %s27, 1
        %s367 = scalar_select %p366, %s27, 1
        %s368 = smul.addr %s365, 2
        %s369 = sadd.s32 %s367, %s368
        %s370 = smul.addr %s369, 4
        %s371 = scalar_lea.vmem %s0, %s370
        %s372 = sadd.s32 %s27, 1
        %p373 = scmp.lt.s32.totalorder %s26, 1
        %s374 = scalar_select %p373, %s26, 1
        %p375 = scmp.lt.s32.totalorder %s372, 1
        %s376 = scalar_select %p375, %s372, 1
        %s377 = smul.addr %s374, 2
        %s378 = sadd.s32 %s376, %s377
        %s379 = smul.addr %s378, 4
        %s380 = scalar_lea.vmem %s1, %s379
        %s381 = sadd.s32 %s27, 1
        %p382 = scmp.lt.s32.totalorder %s26, 1
        %s383 = scalar_select %p382, %s26, 1
        %s384 = smul.addr %s383, 8
        %s385 = smul.addr %s384, 8
        %s386 = scalar_lea.vmem %s2, %s385
        %v387 = vld [vmem:[%s371] sm:$0xf]
        %v388 = vld [vmem:[%s3] sm:$0xff]
        %v389 = vld [vmem:[%s3 + $0x8] sm:$0xff]
        %v390 = vld [vmem:[%s3 + $0x10] sm:$0xff]
        %v391 = vld [vmem:[%s3 + $0x18] sm:$0xff]
        %v392 = vld [vmem:[%s3 + $0x20] sm:$0xff]
        %v393 = vld [vmem:[%s3 + $0x28] sm:$0xff]
        %v394 = vld [vmem:[%s3 + $0x30] sm:$0xff]
        %v395 = vld [vmem:[%s3 + $0x38] sm:$0xff]
        %v396 = vld [vmem:[%s380] sm:$0xf]
        %397 = vrot.lane.b32.xlu0 %v387, 127
        %v398 = vpop.permute.xlu0 %397
        %399 = vrot.lane.b32.xlu0 %v396, 127
        %v400 = vpop.permute.xlu0 %399
        %v401 = vlaneseq
        %v402 = vand.u32 %v401, 127
        %vm403 = vcmp.lt.s32.totalorder %v402, 127
        %v404 = vsel %vm403, %v398, %v400
        %s405 = scalar_lea.vmem %s3, 64
        %v406 = vld [vmem:[%s405] sm:$0xff]
        %v407 = vld [vmem:[%s405 + $0x8] sm:$0xff]
        %v408 = vld [vmem:[%s405 + $0x10] sm:$0xff]
        %v409 = vld [vmem:[%s405 + $0x18] sm:$0xff]
        %v410 = vld [vmem:[%s405 + $0x20] sm:$0xff]
        %v411 = vld [vmem:[%s405 + $0x28] sm:$0xff]
        %v412 = vld [vmem:[%s405 + $0x30] sm:$0xff]
        %v413 = vld [vmem:[%s405 + $0x38] sm:$0xff]
        %vm414 = vcmask 31744
        %v416 = vsel %vm414, %v406, 0
        %v419 = vsel %vm414, %v407, 0
        %v422 = vsel %vm414, %v408, 0
        %v425 = vsel %vm414, %v409, 0
        %v428 = vsel %vm414, %v410, 0
        %v431 = vsel %vm414, %v411, 0
        %v434 = vsel %vm414, %v412, 0
        %v437 = vsel %vm414, %v413, 0
        %vm439 = vcmask 1043456
        %v441 = vsel %vm439, %v404, 0
        %443 = vmatpush.msra.mxu0 0.0
        %444 = vmatpush.msra.mxu0 0.0
        %445 = vmatpush.msra.mxu0 0.0
        %446 = vmatpush.msra.mxu0 0.0
        %447 = vmatpush.msra.mxu0 0.0
        %448 = vmatpush.msra.mxu0 0.0
        %449 = vmatpush.msra.mxu0 0.0
        %450 = vmatpush.msra.mxu0 0.0
        %451 = vmatpush.msra.mxu0 0.0
        %452 = vmatpush.msra.mxu0 0.0
        %453 = vmatpush.msra.mxu0 0.0
        %454 = vmatpush.msra.mxu0 0.0
        %455 = vmatpush.msra.mxu0 0.0
        %456 = vmatpush.msra.mxu0 0.0
        %457 = vmatpush.msra.mxu0 0.0
        %458 = vmatpush.msra.mxu0 %v441
        %459 = vmatmul.f32.gmra.mxu0 %v416
        %v460 = vpop.f32.mrf.mxu0
        %v461 = vadd.f32 0.0, %v460
        %462 = vmatmul.f32.gmra.mxu0 %v419
        %v463 = vpop.f32.mrf.mxu0
        %v464 = vadd.f32 0.0, %v463
        %465 = vmatmul.f32.gmra.mxu0 %v422
        %v466 = vpop.f32.mrf.mxu0
        %v467 = vadd.f32 0.0, %v466
        %468 = vmatmul.f32.gmra.mxu0 %v425
        %v469 = vpop.f32.mrf.mxu0
        %v470 = vadd.f32 0.0, %v469
        %471 = vmatmul.f32.gmra.mxu0 %v428
        %v472 = vpop.f32.mrf.mxu0
        %v473 = vadd.f32 0.0, %v472
        %474 = vmatmul.f32.gmra.mxu0 %v431
        %v475 = vpop.f32.mrf.mxu0
        %v476 = vadd.f32 0.0, %v475
        %477 = vmatmul.f32.gmra.mxu0 %v434
        %v478 = vpop.f32.mrf.mxu0
        %v479 = vadd.f32 0.0, %v478
        %480 = vmatmul.f32.gmra.mxu0 %v437
        %v481 = vpop.f32.mrf.mxu0
        %v482 = vadd.f32 0.0, %v481
        %483 = vdwg.mxu0
        %v485 = vsel %vm414, %v388, 0
        %v488 = vsel %vm414, %v389, 0
        %v491 = vsel %vm414, %v390, 0
        %v494 = vsel %vm414, %v391, 0
        %v497 = vsel %vm414, %v392, 0
        %v500 = vsel %vm414, %v393, 0
        %v503 = vsel %vm414, %v394, 0
        %v506 = vsel %vm414, %v395, 0
        %v509 = vsel %vm439, %v387, 0
        %511 = vmatpush.msra.mxu0 0.0
        %512 = vmatpush.msra.mxu0 0.0
        %513 = vmatpush.msra.mxu0 0.0
        %514 = vmatpush.msra.mxu0 0.0
        %515 = vmatpush.msra.mxu0 0.0
        %516 = vmatpush.msra.mxu0 0.0
        %517 = vmatpush.msra.mxu0 0.0
        %518 = vmatpush.msra.mxu0 0.0
        %519 = vmatpush.msra.mxu0 0.0
        %520 = vmatpush.msra.mxu0 0.0
        %521 = vmatpush.msra.mxu0 0.0
        %522 = vmatpush.msra.mxu0 0.0
        %523 = vmatpush.msra.mxu0 0.0
        %524 = vmatpush.msra.mxu0 0.0
        %525 = vmatpush.msra.mxu0 0.0
        %526 = vmatpush.msra.mxu0 %v509
        %527 = vmatmul.f32.gmra.mxu0 %v485
        %v528 = vpop.f32.mrf.mxu0
        %v529 = vadd.f32 %v461, %v528
        %530 = vmatmul.f32.gmra.mxu0 %v488
        %v531 = vpop.f32.mrf.mxu0
        %v532 = vadd.f32 %v464, %v531
        %533 = vmatmul.f32.gmra.mxu0 %v491
        %v534 = vpop.f32.mrf.mxu0
        %v535 = vadd.f32 %v467, %v534
        %536 = vmatmul.f32.gmra.mxu0 %v494
        %v537 = vpop.f32.mrf.mxu0
        %v538 = vadd.f32 %v470, %v537
        %539 = vmatmul.f32.gmra.mxu0 %v497
        %v540 = vpop.f32.mrf.mxu0
        %v541 = vadd.f32 %v473, %v540
        %542 = vmatmul.f32.gmra.mxu0 %v500
        %v543 = vpop.f32.mrf.mxu0
        %v544 = vadd.f32 %v476, %v543
        %545 = vmatmul.f32.gmra.mxu0 %v503
        %v546 = vpop.f32.mrf.mxu0
        %v547 = vadd.f32 %v479, %v546
        %548 = vmatmul.f32.gmra.mxu0 %v506
        %v549 = vpop.f32.mrf.mxu0
        %v550 = vadd.f32 %v482, %v549
        %551 = vdwg.mxu0
        %552 = vrot.lane.b32.xlu0 %v387, 126
        %v553 = vpop.permute.xlu0 %552
        %554 = vrot.lane.b32.xlu0 %v396, 126
        %v555 = vpop.permute.xlu0 %554
        %vm556 = vcmp.lt.s32.totalorder %v402, 126
        %v557 = vsel %vm556, %v553, %v555
        %s558 = scalar_lea.vmem %s3, 128
        %v559 = vld [vmem:[%s558] sm:$0xff]
        %v560 = vld [vmem:[%s558 + $0x8] sm:$0xff]
        %v561 = vld [vmem:[%s558 + $0x10] sm:$0xff]
        %v562 = vld [vmem:[%s558 + $0x18] sm:$0xff]
        %v563 = vld [vmem:[%s558 + $0x20] sm:$0xff]
        %v564 = vld [vmem:[%s558 + $0x28] sm:$0xff]
        %v565 = vld [vmem:[%s558 + $0x30] sm:$0xff]
        %v566 = vld [vmem:[%s558 + $0x38] sm:$0xff]
        %v568 = vsel %vm414, %v559, 0
        %v571 = vsel %vm414, %v560, 0
        %v574 = vsel %vm414, %v561, 0
        %v577 = vsel %vm414, %v562, 0
        %v580 = vsel %vm414, %v563, 0
        %v583 = vsel %vm414, %v564, 0
        %v586 = vsel %vm414, %v565, 0
        %v589 = vsel %vm414, %v566, 0
        %v592 = vsel %vm439, %v557, 0
        %594 = vmatpush.msra.mxu0 0.0
        %595 = vmatpush.msra.mxu0 0.0
        %596 = vmatpush.msra.mxu0 0.0
        %597 = vmatpush.msra.mxu0 0.0
        %598 = vmatpush.msra.mxu0 0.0
        %599 = vmatpush.msra.mxu0 0.0
        %600 = vmatpush.msra.mxu0 0.0
        %601 = vmatpush.msra.mxu0 0.0
        %602 = vmatpush.msra.mxu0 0.0
        %603 = vmatpush.msra.mxu0 0.0
        %604 = vmatpush.msra.mxu0 0.0
        %605 = vmatpush.msra.mxu0 0.0
        %606 = vmatpush.msra.mxu0 0.0
        %607 = vmatpush.msra.mxu0 0.0
        %608 = vmatpush.msra.mxu0 0.0
        %609 = vmatpush.msra.mxu0 %v592
        %610 = vmatmul.f32.gmra.mxu0 %v568
        %v611 = vpop.f32.mrf.mxu0
        %v612 = vadd.f32 0.0, %v611
        %613 = vmatmul.f32.gmra.mxu0 %v571
        %v614 = vpop.f32.mrf.mxu0
        %v615 = vadd.f32 0.0, %v614
        %616 = vmatmul.f32.gmra.mxu0 %v574
        %v617 = vpop.f32.mrf.mxu0
        %v618 = vadd.f32 0.0, %v617
        %619 = vmatmul.f32.gmra.mxu0 %v577
        %v620 = vpop.f32.mrf.mxu0
        %v621 = vadd.f32 0.0, %v620
        %622 = vmatmul.f32.gmra.mxu0 %v580
        %v623 = vpop.f32.mrf.mxu0
        %v624 = vadd.f32 0.0, %v623
        %625 = vmatmul.f32.gmra.mxu0 %v583
        %v626 = vpop.f32.mrf.mxu0
        %v627 = vadd.f32 0.0, %v626
        %628 = vmatmul.f32.gmra.mxu0 %v586
        %v629 = vpop.f32.mrf.mxu0
        %v630 = vadd.f32 0.0, %v629
        %631 = vmatmul.f32.gmra.mxu0 %v589
        %v632 = vpop.f32.mrf.mxu0
        %v633 = vadd.f32 0.0, %v632
        %634 = vdwg.mxu0
        %v635 = vadd.f32 %v529, %v612
        %v636 = vadd.f32 %v532, %v615
        %v637 = vadd.f32 %v535, %v618
        %v638 = vadd.f32 %v538, %v621
        %v639 = vadd.f32 %v541, %v624
        %v640 = vadd.f32 %v544, %v627
        %v641 = vadd.f32 %v547, %v630
        %v642 = vadd.f32 %v550, %v633
        %v643 = vld [vmem:[%s386] sm:$0xff]
        %v644 = vld [vmem:[%s386 + $0x8] sm:$0xff]
        %v645 = vld [vmem:[%s386 + $0x10] sm:$0xff]
        %v646 = vld [vmem:[%s386 + $0x18] sm:$0xff]
        %v647 = vld [vmem:[%s386 + $0x20] sm:$0xff]
        %v648 = vld [vmem:[%s386 + $0x28] sm:$0xff]
        %v649 = vld [vmem:[%s386 + $0x30] sm:$0xff]
        %v650 = vld [vmem:[%s386 + $0x38] sm:$0xff]
        %652 = vset.pattern.permute.xlu0 0
        %653 = vperm.xlu0 %652, %v643
        %v654 = vpop.permute.xlu0 %653
        %657 = vset.pattern.permute.xlu0 0
        %658 = vperm.xlu0 %657, %v644
        %v659 = vpop.permute.xlu0 %658
        %662 = vset.pattern.permute.xlu0 0
        %663 = vperm.xlu0 %662, %v645
        %v664 = vpop.permute.xlu0 %663
        %667 = vset.pattern.permute.xlu0 0
        %668 = vperm.xlu0 %667, %v646
        %v669 = vpop.permute.xlu0 %668
        %672 = vset.pattern.permute.xlu0 0
        %673 = vperm.xlu0 %672, %v647
        %v674 = vpop.permute.xlu0 %673
        %677 = vset.pattern.permute.xlu0 0
        %678 = vperm.xlu0 %677, %v648
        %v679 = vpop.permute.xlu0 %678
        %682 = vset.pattern.permute.xlu0 0
        %683 = vperm.xlu0 %682, %v649
        %v684 = vpop.permute.xlu0 %683
        %687 = vset.pattern.permute.xlu0 0
        %688 = vperm.xlu0 %687, %v650
        %v689 = vpop.permute.xlu0 %688
        %v691 = vadd.f32 %v635, %v654
        %v692 = vadd.f32 %v636, %v659
        %v693 = vadd.f32 %v637, %v664
        %v694 = vadd.f32 %v638, %v669
        %v695 = vadd.f32 %v639, %v674
        %v696 = vadd.f32 %v640, %v679
        %v697 = vadd.f32 %v641, %v684
        %v698 = vadd.f32 %v642, %v689
        %v699 = vld [vmem:[%s4] sm:$0xff]
        %v700 = vld [vmem:[%s4 + $0x8] sm:$0xff]
        %v701 = vld [vmem:[%s4 + $0x10] sm:$0xff]
        %v702 = vld [vmem:[%s4 + $0x18] sm:$0xff]
        %v703 = vld [vmem:[%s4 + $0x20] sm:$0xff]
        %v704 = vld [vmem:[%s4 + $0x28] sm:$0xff]
        %v705 = vld [vmem:[%s4 + $0x30] sm:$0xff]
        %v706 = vld [vmem:[%s4 + $0x38] sm:$0xff]
        %v707 = vld [vmem:[%s5] sm:$0xff]
        %v708 = vld [vmem:[%s5 + $0x8] sm:$0xff]
        %v709 = vld [vmem:[%s5 + $0x10] sm:$0xff]
        %v710 = vld [vmem:[%s5 + $0x18] sm:$0xff]
        %v711 = vld [vmem:[%s5 + $0x20] sm:$0xff]
        %v712 = vld [vmem:[%s5 + $0x28] sm:$0xff]
        %v713 = vld [vmem:[%s5 + $0x30] sm:$0xff]
        %v714 = vld [vmem:[%s5 + $0x38] sm:$0xff]
        %716 = vset.pattern.permute.xlu0 0
        %717 = vperm.xlu0 %716, %v707
        %v718 = vpop.permute.xlu0 %717
        %721 = vset.pattern.permute.xlu0 0
        %722 = vperm.xlu0 %721, %v708
        %v723 = vpop.permute.xlu0 %722
        %726 = vset.pattern.permute.xlu0 0
        %727 = vperm.xlu0 %726, %v709
        %v728 = vpop.permute.xlu0 %727
        %731 = vset.pattern.permute.xlu0 0
        %732 = vperm.xlu0 %731, %v710
        %v733 = vpop.permute.xlu0 %732
        %736 = vset.pattern.permute.xlu0 0
        %737 = vperm.xlu0 %736, %v711
        %v738 = vpop.permute.xlu0 %737
        %741 = vset.pattern.permute.xlu0 0
        %742 = vperm.xlu0 %741, %v712
        %v743 = vpop.permute.xlu0 %742
        %746 = vset.pattern.permute.xlu0 0
        %747 = vperm.xlu0 %746, %v713
        %v748 = vpop.permute.xlu0 %747
        %751 = vset.pattern.permute.xlu0 0
        %752 = vperm.xlu0 %751, %v714
        %v753 = vpop.permute.xlu0 %752
        %vm755 = vcmask 523264
        %v757 = vsel %vm755, %v699, 0
        %v760 = vsel %vm755, %v700, 0
        %v763 = vsel %vm755, %v701, 0
        %v766 = vsel %vm755, %v702, 0
        %v769 = vsel %vm755, %v703, 0
        %v772 = vsel %vm755, %v704, 0
        %v775 = vsel %vm755, %v705, 0
        %v778 = vsel %vm755, %v706, 0
        %780 = vmatpush.msra.mxu0 0.0
        %781 = vmatpush.msra.mxu0 0.0
        %782 = vmatpush.msra.mxu0 0.0
        %783 = vmatpush.msra.mxu0 0.0
        %784 = vmatpush.msra.mxu0 0.0
        %785 = vmatpush.msra.mxu0 0.0
        %786 = vmatpush.msra.mxu0 0.0
        %787 = vmatpush.msra.mxu0 0.0
        %788 = vmatpush.msra.mxu0 %v698
        %789 = vmatpush.msra.mxu0 %v697
        %790 = vmatpush.msra.mxu0 %v696
        %791 = vmatpush.msra.mxu0 %v695
        %792 = vmatpush.msra.mxu0 %v694
        %793 = vmatpush.msra.mxu0 %v693
        %794 = vmatpush.msra.mxu0 %v692
        %795 = vmatpush.msra.mxu0 %v691
        %796 = vmatmul.f32.gmra.mxu0 %v757
        %v797 = vpop.f32.mrf.mxu0
        %v798 = vadd.f32 %v718, %v797
        %799 = vmatmul.f32.gmra.mxu0 %v760
        %v800 = vpop.f32.mrf.mxu0
        %v801 = vadd.f32 %v723, %v800
        %802 = vmatmul.f32.gmra.mxu0 %v763
        %v803 = vpop.f32.mrf.mxu0
        %v804 = vadd.f32 %v728, %v803
        %805 = vmatmul.f32.gmra.mxu0 %v766
        %v806 = vpop.f32.mrf.mxu0
        %v807 = vadd.f32 %v733, %v806
        %808 = vmatmul.f32.gmra.mxu0 %v769
        %v809 = vpop.f32.mrf.mxu0
        %v810 = vadd.f32 %v738, %v809
        %811 = vmatmul.f32.gmra.mxu0 %v772
        %v812 = vpop.f32.mrf.mxu0
        %v813 = vadd.f32 %v743, %v812
        %814 = vmatmul.f32.gmra.mxu0 %v775
        %v815 = vpop.f32.mrf.mxu0
        %v816 = vadd.f32 %v748, %v815
        %817 = vmatmul.f32.gmra.mxu0 %v778
        %v818 = vpop.f32.mrf.mxu0
        %v819 = vadd.f32 %v753, %v818
        %820 = vdwg.mxu0
        %v821 = vmax.f32 %v798, 0.0
        %v822 = vmax.f32 %v801, 0.0
        %v823 = vmax.f32 %v804, 0.0
        %v824 = vmax.f32 %v807, 0.0
        %v825 = vmax.f32 %v810, 0.0
        %v826 = vmax.f32 %v813, 0.0
        %v827 = vmax.f32 %v816, 0.0
        %v828 = vmax.f32 %v819, 0.0
        %v829 = vadd.f32 %v691, %v821
        %v830 = vadd.f32 %v692, %v822
        %v831 = vadd.f32 %v693, %v823
        %v832 = vadd.f32 %v694, %v824
        %v833 = vadd.f32 %v695, %v825
        %v834 = vadd.f32 %v696, %v826
        %v835 = vadd.f32 %v697, %v827
        %v836 = vadd.f32 %v698, %v828
        %v837 = vld [vmem:[%s6] sm:$0xf]
        %v838 = vld [vmem:[%s7] sm:$0xf]
        %840 = vset.pattern.permute.xlu0 0
        %841 = vperm.xlu0 %840, %v838
        %v842 = vpop.permute.xlu0 %841
        %v845 = vsel %vm755, %v837, 0
        %847 = vmatpush.msra.mxu0 0.0
        %848 = vmatpush.msra.mxu0 0.0
        %849 = vmatpush.msra.mxu0 0.0
        %850 = vmatpush.msra.mxu0 0.0
        %851 = vmatpush.msra.mxu0 0.0
        %852 = vmatpush.msra.mxu0 0.0
        %853 = vmatpush.msra.mxu0 0.0
        %854 = vmatpush.msra.mxu0 0.0
        %855 = vmatpush.msra.mxu0 %v836
        %856 = vmatpush.msra.mxu0 %v835
        %857 = vmatpush.msra.mxu0 %v834
        %858 = vmatpush.msra.mxu0 %v833
        %859 = vmatpush.msra.mxu0 %v832
        %860 = vmatpush.msra.mxu0 %v831
        %861 = vmatpush.msra.mxu0 %v830
        %862 = vmatpush.msra.mxu0 %v829
        %863 = vmatmul.f32.gmra.mxu0 %v845
        %v864 = vpop.f32.mrf.mxu0
        %v865 = vadd.f32 %v842, %v864
        %866 = vdwg.mxu0
        %867 = vst [vmem:[%s363] sm:$0xf] %v865
        %s868 = sand.u32 %s233, 1
        %s869 = scalar_lea.sflag [#allocation3], %s868
        %s870 = sand.u32 %s233, 1
        %s871 = smul.addr %s870, 4
        %s872 = scalar_lea.vmem [#allocation2], %s871
        // Predicated region
        $region53: #{tpu_custom_call.1} parent=51 // pred_check
          %p873 = pneg %p243
        $region54: #{tpu_custom_call.1} parent=51 // pred_check_branch
          %875 = sbr.rel (%p873) target = $region56
        $region55: #{tpu_custom_call.1} parent=51 // pred_region
          %877 = vsyncadd %s869, 0
          %s878 = sadd.s32 %s27, %s26
          %s879 = smul.addr %s878, 4
          %s880 = scalar_lea.hbm %s8, %s879
          %s882 = sshll.u32 %s872, 4
          %s883 = int_to_ptr.vmem [resolvable:$true] %s882
          %s884 = sshll.u32 %s880, 4
          %s885 = int_to_ptr.hbm [resolvable:$true] %s884
          %887 = dma.vmem_to_hbm [thread:$0]  %s883, 64, %s885, %s869
        $region56: #{tpu_custom_call.1} parent=51 // pred_fallthru
          _
      $region52: #{tpu_custom_call.1} parent=5 // pred_fallthru
        _
      %p888 = scmp.le.s32.totalorder 2, %s17
      // Predicated region
      $region57: #{tpu_custom_call.1} parent=5 // pred_check
        %p889 = pneg %p888
      $region58: #{tpu_custom_call.1} parent=5 // pred_check_branch
        %891 = sbr.rel (%p889) target = $region60
      $region59: #{tpu_custom_call.1} parent=5 // pred_region
        %s892 = ssub.s32 %s17, 2
        // Predicated region
        $region61: #{tpu_custom_call.1} parent=59 // pred_check
          %p893 = pneg %p249
        $region62: #{tpu_custom_call.1} parent=59 // pred_check_branch
          %895 = sbr.rel (%p893) target = $region64
        $region63: #{tpu_custom_call.1} parent=59 // pred_region
          %s896 = sand.u32 %s234, 1
          %s897 = scalar_lea.sflag [#allocation3], %s896
          %s898 = sand.u32 %s234, 1
          %s899 = smul.addr %s898, 4
          %s900 = scalar_lea.vmem [#allocation2], %s899
          %902 = dma.done %s897, 64
        $region64: #{tpu_custom_call.1} parent=59 // pred_fallthru
          _
      $region60: #{tpu_custom_call.1} parent=5 // pred_fallthru
        _
    $region6: #{tpu_custom_call.1} parent=1 // loop_footer
      %s21 = sadd.s32 1, %s17
    $region7: #{tpu_custom_call.1} parent=1 // loop_footer_branch
      %16 = sbr.rel target = $region3
    $region8: #{tpu_custom_call.1} parent=1 // loop_exit
      _
    %903 = vsyncpa [#allocation3], 1
    %s904 = scalar_lea.sflag [#allocation3], 1
    %905 = vsyncpa %s904, 1

</llo_original>
